<compile_context>
chip_gen: v5e
topology: v5e:2x2
jax: 0.10.0
libtpu: 0.0.40
codegen_flags: <defaults>
</compile_context>

<pallas_src>
import jax
import jax.numpy as jnp
from jax.experimental import pallas as pl
from jax.experimental.pallas import tpu as pltpu

H = 32        # hidden_dim
V = 5         # vector_dim
HP = 128      # lane-padded width

# ---- small f32 slab: one (1, <=HP) parameter row per slot, zero-padded ----
R_WL1, R_WR1, R_BL1, R_BL2, R_BFOLD, R_WM1E0, R_WM1E1, R_WM2T = range(8)
SMALL_ROWS = 8                 # (8, 128) f32  ~= 4 KiB

# ---- big bf16 slab: MXU weight blocks, zero-padded to HP lanes/rows ----
ROW_W2 = 0                     # rows [0, 2*HP): fused [Wl2; Wr2] for K=256 matmul
ROW_WCZ = 2 * HP               # rows [2*HP, 3*HP): folded Wv @ Wm1z
BIG_ROWS = 3 * HP              # (384, 128) bf16 ~= 96 KiB


def gnn_decision_kernel(scal_ref, adj_ref, x_ref, small_ref, big_ref, o_ref):
    f32 = jnp.float32
    bf16 = jnp.bfloat16
    b = pl.program_id(0)
    n = adj_ref.shape[0]

    temp = scal_ref[0, b]
    t = scal_ref[1, b]
    bm2 = scal_ref[2, b]

    adj = adj_ref[...]                                   # (N, N) bf16, A[dst,src]=1/in_deg
    x = x_ref[...]                                       # (N, 1) f32 node ages

    wl1 = small_ref[R_WL1:R_WL1 + 1, :]                  # (1, HP) f32 rows
    wr1 = small_ref[R_WR1:R_WR1 + 1, :]
    bl1 = small_ref[R_BL1:R_BL1 + 1, :]
    bl2 = small_ref[R_BL2:R_BL2 + 1, :]

    # ---- SAGEConv 1: A @ (x * Wl1) == (A @ x) @ Wl1 for node_in_dim == 1 ----
    agg1 = jnp.dot(adj, (x * wl1).astype(bf16), preferred_element_type=f32)   # (N, HP)
    h1 = jnp.maximum(agg1 + x * wr1 + bl1, 0.0)                               # (N, HP) f32

    # ---- SAGEConv 2: fused K=2*HP bf16 MXU matmul, f32 accumulation ----
    h1_bf = h1.astype(bf16)
    agg2 = jnp.dot(adj, h1_bf, preferred_element_type=f32)                    # (N, HP)
    cat = jnp.concatenate([agg2.astype(bf16), h1_bf], axis=-1)                # (N, 2*HP)
    w2 = big_ref[pl.ds(ROW_W2, 2 * HP), :]                                    # (2*HP, HP) bf16
    h2 = jnp.maximum(jnp.dot(cat, w2, preferred_element_type=f32) + bl2, 0.0)

    # ---- global_mean_pool (one graph per grid step: batch vector is all zeros) ----
    c = jnp.sum(h2, axis=0, keepdims=True) * (1.0 / n)                        # (1, HP)

    # ---- to_vector + MLP layer 1, folded on the host: W_cz = Wv @ Wm1z ----
    wcz = big_ref[pl.ds(ROW_WCZ, HP), :]                                      # (HP, HP) bf16
    wm1e0 = small_ref[R_WM1E0:R_WM1E0 + 1, :]
    wm1e1 = small_ref[R_WM1E1:R_WM1E1 + 1, :]
    bfold = small_ref[R_BFOLD:R_BFOLD + 1, :]
    m = jnp.dot(c.astype(bf16), wcz, preferred_element_type=f32)
    m = jnp.maximum(m + temp * wm1e0 + t * wm1e1 + bfold, 0.0)                # (1, HP)

    # ---- MLP layer 2 (width-1 output -> VPU mul + lane reduce) + Softplus ----
    wm2t = small_ref[R_WM2T:R_WM2T + 1, :]
    out = jnp.sum(m * wm2t, axis=-1, keepdims=True) + bm2                     # (1, 1)
    o_ref[...] = jnp.where(out > 20.0, out,
                           jnp.log1p(jnp.exp(jnp.minimum(out, 20.0))))


def pack_params(params):
    """Pack parameters into a small f32 slab + a big bf16 MXU-weight slab.

    The to_vector / MLP-layer-1 pair is folded here (no nonlinearity between
    them): W_cz = Wv @ Wm1z, b_fold = bv @ Wm1z + bm1.
    """
    small = jnp.zeros((SMALL_ROWS, HP), jnp.float32)

    def put_row(s, r, vec):
        vec = jnp.asarray(vec, jnp.float32).reshape(-1)
        return s.at[r, :vec.shape[0]].set(vec)

    def put_block(s, r0, mat):
        mat = jnp.asarray(mat, jnp.float32)
        return s.at[r0:r0 + mat.shape[0], :mat.shape[1]].set(mat)

    b_fold = params["bv"] @ params["wm1z"] + params["bm1"]
    small = put_row(small, R_WL1, params["wl1"])
    small = put_row(small, R_WR1, params["wr1"])
    small = put_row(small, R_BL1, params["bl1"])
    small = put_row(small, R_BL2, params["bl2"])
    small = put_row(small, R_BFOLD, b_fold)
    small = put_row(small, R_WM1E0, params["wm1e"][0])
    small = put_row(small, R_WM1E1, params["wm1e"][1])
    small = put_row(small, R_WM2T, params["wm2"])

    big = jnp.zeros((BIG_ROWS, HP), jnp.float32)
    big = put_block(big, ROW_W2, params["wl2"])            # multiplies agg2 lanes
    big = put_block(big, ROW_W2 + HP, params["wr2"])       # multiplies h1 lanes
    big = put_block(big, ROW_WCZ, params["wv"] @ params["wm1z"])
    big = big.astype(jnp.bfloat16)

    bm2 = jnp.asarray(params["bm2"], jnp.float32).reshape(())
    return small, big, bm2


def build_normalized_adjacency(edge_index, num_nodes):
    """Dense row-normalized adjacency A[dst, src] = 1/in_deg(dst), stored bf16.

    Built once per graph topology; callers should cache and reuse it across
    forward calls instead of rebuilding it every step.
    """
    src, dst = edge_index[0], edge_index[1]
    a = jnp.zeros((num_nodes, num_nodes), jnp.float32).at[dst, src].add(1.0)
    deg = a.sum(axis=1, keepdims=True)
    a = a * jnp.where(deg > 0.0, 1.0 / deg, 0.0)
    return a.astype(jnp.bfloat16)


def gnn_decision_forward_batched(ages, adj, temps, ts, small, big, bm2):
    """Batched forward over B independent graph instances.

    ages: (B, N, 1) f32; adj: (B, N, N) bf16; temps/ts: (B,) f32.
    Returns (B,) f32 — one positive scalar per graph (matches out.view(-1)).
    """
    B, N, _ = ages.shape
    scal = jnp.stack([temps.astype(jnp.float32),
                      ts.astype(jnp.float32),
                      jnp.broadcast_to(jnp.asarray(bm2, jnp.float32), (B,))],
                     axis=0)                                     # (3, B) -> SMEM

    out = pl.pallas_call(
        gnn_decision_kernel,
        out_shape=jax.ShapeDtypeStruct((B, 1, 1), jnp.float32),
        grid=(B,),
        in_specs=[
            pl.BlockSpec(memory_space=pltpu.MemorySpace.SMEM),          # scalars
            pl.BlockSpec((None, N, N), lambda b: (b, 0, 0)),            # adjacency
            pl.BlockSpec((None, N, 1), lambda b: (b, 0, 0)),            # node ages
            pl.BlockSpec((SMALL_ROWS, HP), lambda b: (0, 0)),           # f32 slab (resident)
            pl.BlockSpec((BIG_ROWS, HP), lambda b: (0, 0)),             # bf16 slab (resident)
        ],
        out_specs=pl.BlockSpec((None, 1, 1), lambda b: (b, 0, 0)),
        compiler_params=pltpu.CompilerParams(
            dimension_semantics=("parallel",)),                         # 2 TCs on v7x
    )(scal, adj, ages.astype(jnp.float32), small, big)
    return out.reshape(B)


def init_params(key, node_in_dim=1, hidden_dim=H, vector_dim=V):
    """Deterministic synthetic init. Weights stored pre-transposed for x @ W."""
    ks = jax.random.split(key, 12)

    def lin(k, fan_in, fan_out):
        bound = 1.0 / jnp.sqrt(jnp.float32(fan_in))
        return jax.random.uniform(k, (fan_in, fan_out), jnp.float32, -bound, bound)

    return {
        # SAGEConv 1: lin_l (aggregated, with bias), lin_r (root, no bias)
        "wl1": lin(ks[0], node_in_dim, hidden_dim),
        "wr1": lin(ks[1], node_in_dim, hidden_dim),
        "bl1": lin(ks[2], 1, hidden_dim),
        # SAGEConv 2
        "wl2": lin(ks[3], hidden_dim, hidden_dim),
        "wr2": lin(ks[4], hidden_dim, hidden_dim),
        "bl2": lin(ks[5], 1, hidden_dim),
        # to_vector
        "wv": lin(ks[6], hidden_dim, vector_dim),
        "bv": lin(ks[7], 1, vector_dim),
        # mlp layer 1 split into z-part and extras([temp, t])-part
        "wm1z": lin(ks[8], vector_dim, hidden_dim),
        "wm1e": lin(ks[9], 2, hidden_dim),
        "bm1": lin(ks[10], 1, hidden_dim),
        # mlp layer 2
        "wm2": lin(ks[11], hidden_dim, 1),
        "bm2": jnp.zeros((1, 1), jnp.float32),
    }


def reference_forward(ages, adj_bf16, temp, t, params):
    """Pure-JAX reference mirroring the kernel's numeric path (bf16 adjacency,
    bf16 MXU weights, f32 accumulation/elementwise).  NOTE: this deliberately
    tracks the kernel, not the exact f32 PyTorch model."""
    f32, bf16 = jnp.float32, jnp.bfloat16
    x = ages.astype(f32).reshape(-1, 1)
    agg1 = jnp.dot(adj_bf16, (x * params["wl1"]).astype(bf16),
                   preferred_element_type=f32)
    h1 = jnp.maximum(agg1 + x * params["wr1"] + params["bl1"], 0.0)
    h1b = h1.astype(bf16)
    agg2 = jnp.dot(adj_bf16, h1b, preferred_element_type=f32)
    w2 = jnp.concatenate([params["wl2"], params["wr2"]], axis=0).astype(bf16)
    cat = jnp.concatenate([agg2.astype(bf16), h1b], axis=-1)
    h2 = jnp.maximum(jnp.dot(cat, w2, preferred_element_type=f32) + params["bl2"], 0.0)
    c = h2.mean(axis=0, keepdims=True)
    wcz = (params["wv"] @ params["wm1z"]).astype(bf16)
    bfold = params["bv"] @ params["wm1z"] + params["bm1"]
    extras = jnp.array([[float(temp), float(t)]], f32)
    m = jnp.maximum(jnp.dot(c.astype(bf16), wcz, preferred_element_type=f32)
                    + extras @ params["wm1e"] + bfold, 0.0)
    o = m @ params["wm2"] + params["bm2"]
    return jnp.where(o > 20.0, o,
                     jnp.log1p(jnp.exp(jnp.minimum(o, 20.0)))).reshape(-1)


if __name__ == "__main__":
    key = jax.random.PRNGKey(0)
    k_param, k_ages = jax.random.split(key)

    N = 16               # nodes per graph
    B = 8                # batched forward evaluations (amortize dispatch + param DMA)
    params = init_params(k_param, node_in_dim=1, hidden_dim=H, vector_dim=V)
    small, big, bm2 = pack_params(params)          # packed once, reused across calls

    # node ages (B, N, 1)
    ages = jax.random.uniform(k_ages, (B, N, 1), jnp.float32, 0.0, 10.0)

    # simple bidirectional ring graph shared by every instance in the demo
    idx = jnp.arange(N, dtype=jnp.int32)
    nxt = (idx + 1) % N
    edge_index = jnp.stack([jnp.concatenate([idx, nxt]),
                            jnp.concatenate([nxt, idx])], axis=0)      # (2, 2N)
    adj1 = build_normalized_adjacency(edge_index, N)                   # (N, N) bf16
    adj = jnp.broadcast_to(adj1, (B, N, N))

    temps = jnp.linspace(0.5, 2.0, B).astype(jnp.float32)
    ts = (jnp.arange(B, dtype=jnp.float32) + 1.0)

    forward = jax.jit(gnn_decision_forward_batched)
    out = jax.block_until_ready(forward(ages, adj, temps, ts, small, big, bm2))

    ref = jnp.concatenate([
        reference_forward(ages[i], adj[i], float(temps[i]), float(ts[i]), params)
        for i in range(B)])

    assert out.shape == (B,)
    assert bool(jnp.all(out > 0.0))
    assert jnp.allclose(out, ref, atol=1e-2, rtol=1e-2), (out, ref)
    print("KERNEL_OK")
</pallas_src>

<mosaic_0001>
module attributes {stable_mosaic.version = 11 : i64} {
  func.func @gnn_decision_kernel(%arg0: i32, %arg1: memref<3x8xf32, #tpu.memory_space<smem>>, %arg2: memref<1x16x16xbf16, #tpu.memory_space<vmem>>, %arg3: memref<1x16x1xf32, #tpu.memory_space<vmem>>, %arg4: memref<8x128xf32, #tpu.memory_space<vmem>>, %arg5: memref<384x128xbf16, #tpu.memory_space<vmem>>, %arg6: memref<1x1x1xf32, #tpu.memory_space<vmem>>) attributes {dimension_semantics = [#tpu.dimension_semantics<parallel>], iteration_bounds = array<i64: 8>, scalar_prefetch = 0 : i64, scratch_operands = 0 : i64, tpu.core_type = #tpu.core_type<tc>, window_params = [{transform_indices = @transform_0, window_bounds = array<i64: 3, 8>}, {transform_indices = @transform_1, window_bounds = array<i64: 1, 16, 16>}, {transform_indices = @transform_2, window_bounds = array<i64: 1, 16, 1>}, {pipeline_mode = #tpu.pipeline_mode<synchronous>, transform_indices = @transform_3, window_bounds = array<i64: 8, 128>}, {pipeline_mode = #tpu.pipeline_mode<synchronous>, transform_indices = @transform_4, window_bounds = array<i64: 384, 128>}, {transform_indices = @transform_5, window_bounds = array<i64: 1, 1, 1>}]} {
    %c0 = arith.constant 0 : index
    %0 = arith.index_cast %arg0 : i32 to index
    %1 = memref.load %arg1[%c0, %0] : memref<3x8xf32, #tpu.memory_space<smem>>
    %c1 = arith.constant 1 : index
    %2 = arith.index_cast %arg0 : i32 to index
    %3 = memref.load %arg1[%c1, %2] : memref<3x8xf32, #tpu.memory_space<smem>>
    %c2 = arith.constant 2 : index
    %4 = arith.index_cast %arg0 : i32 to index
    %5 = memref.load %arg1[%c2, %4] : memref<3x8xf32, #tpu.memory_space<smem>>
    %c0_0 = arith.constant 0 : index
    %c0_1 = arith.constant 0 : index
    %c0_2 = arith.constant 0 : index
    %6 = vector.load %arg2[%c0_0, %c0_1, %c0_2] : memref<1x16x16xbf16, #tpu.memory_space<vmem>>, vector<1x16x16xbf16>
    %7 = vector.shape_cast %6 : vector<1x16x16xbf16> to vector<16x16xbf16>
    %c0_3 = arith.constant 0 : index
    %c0_4 = arith.constant 0 : index
    %c0_5 = arith.constant 0 : index
    %8 = vector.load %arg3[%c0_3, %c0_4, %c0_5] : memref<1x16x1xf32, #tpu.memory_space<vmem>>, vector<1x16x1xf32>
    %9 = vector.shape_cast %8 : vector<1x16x1xf32> to vector<16x1xf32>
    %c0_6 = arith.constant 0 : index
    %c0_7 = arith.constant 0 : index
    %10 = vector.load %arg4[%c0_6, %c0_7] : memref<8x128xf32, #tpu.memory_space<vmem>>, vector<1x128xf32>
    %c1_8 = arith.constant 1 : index
    %c0_9 = arith.constant 0 : index
    %11 = vector.load %arg4[%c1_8, %c0_9] : memref<8x128xf32, #tpu.memory_space<vmem>>, vector<1x128xf32>
    %c2_10 = arith.constant 2 : index
    %c0_11 = arith.constant 0 : index
    %12 = vector.load %arg4[%c2_10, %c0_11] : memref<8x128xf32, #tpu.memory_space<vmem>>, vector<1x128xf32>
    %c3 = arith.constant 3 : index
    %c0_12 = arith.constant 0 : index
    %13 = vector.load %arg4[%c3, %c0_12] : memref<8x128xf32, #tpu.memory_space<vmem>>, vector<1x128xf32>
    %14 = vector.broadcast %9 : vector<16x1xf32> to vector<16x128xf32>
    %15 = vector.broadcast %10 : vector<1x128xf32> to vector<16x128xf32>
    %16 = arith.mulf %14, %15 : vector<16x128xf32>
    %17 = arith.truncf %16 : vector<16x128xf32> to vector<16x128xbf16>
    %cst = arith.constant dense<0.000000e+00> : vector<16x128xf32>
    %18 = tpu.matmul %7, %17, %cst {dimension_numbers = #tpu.dot_dimension_numbers<[1], [0], [0], [1], [0, 0, 1, 1], [], []>} : vector<16x16xbf16>, vector<16x128xbf16>, vector<16x128xf32> -> vector<16x128xf32>
    %19 = vector.broadcast %9 : vector<16x1xf32> to vector<16x128xf32>
    %20 = vector.broadcast %11 : vector<1x128xf32> to vector<16x128xf32>
    %21 = arith.mulf %19, %20 : vector<16x128xf32>
    %22 = arith.addf %18, %21 : vector<16x128xf32>
    %23 = vector.broadcast %12 : vector<1x128xf32> to vector<16x128xf32>
    %24 = arith.addf %22, %23 : vector<16x128xf32>
    %cst_13 = arith.constant 0.000000e+00 : f32
    %25 = vector.broadcast %cst_13 : f32 to vector<16x128xf32>
    %26 = arith.maximumf %24, %25 : vector<16x128xf32>
    %27 = arith.truncf %26 : vector<16x128xf32> to vector<16x128xbf16>
    %cst_14 = arith.constant dense<0.000000e+00> : vector<16x128xf32>
    %28 = tpu.matmul %7, %27, %cst_14 {dimension_numbers = #tpu.dot_dimension_numbers<[1], [0], [0], [1], [0, 0, 1, 1], [], []>} : vector<16x16xbf16>, vector<16x128xbf16>, vector<16x128xf32> -> vector<16x128xf32>
    %29 = arith.truncf %28 : vector<16x128xf32> to vector<16x128xbf16>
    %30 = tpu.concatenate %29, %27 in 1 : vector<16x128xbf16>, vector<16x128xbf16> -> vector<16x256xbf16>
    %c0_15 = arith.constant 0 : index
    %c0_16 = arith.constant 0 : index
    %31 = vector.load %arg5[%c0_15, %c0_16] : memref<384x128xbf16, #tpu.memory_space<vmem>>, vector<256x128xbf16>
    %cst_17 = arith.constant dense<0.000000e+00> : vector<16x128xf32>
    %32 = tpu.matmul %30, %31, %cst_17 {dimension_numbers = #tpu.dot_dimension_numbers<[1], [0], [0], [1], [0, 0, 1, 1], [], []>} : vector<16x256xbf16>, vector<256x128xbf16>, vector<16x128xf32> -> vector<16x128xf32>
    %33 = vector.broadcast %13 : vector<1x128xf32> to vector<16x128xf32>
    %34 = arith.addf %32, %33 : vector<16x128xf32>
    %cst_18 = arith.constant 0.000000e+00 : f32
    %35 = vector.broadcast %cst_18 : f32 to vector<16x128xf32>
    %36 = arith.maximumf %34, %35 : vector<16x128xf32>
    %cst_19 = arith.constant dense<0.000000e+00> : vector<128xf32>
    %37 = vector.multi_reduction <add>, %36, %cst_19 [0] : vector<16x128xf32> to vector<128xf32>
    %38 = vector.shape_cast %37 : vector<128xf32> to vector<1x128xf32>
    %cst_20 = arith.constant 6.250000e-02 : f32
    %39 = vector.broadcast %cst_20 : f32 to vector<1x128xf32>
    %40 = arith.mulf %38, %39 : vector<1x128xf32>
    %c256 = arith.constant 256 : index
    %c0_21 = arith.constant 0 : index
    %41 = vector.load %arg5[%c256, %c0_21] : memref<384x128xbf16, #tpu.memory_space<vmem>>, vector<128x128xbf16>
    %c5 = arith.constant 5 : index
    %c0_22 = arith.constant 0 : index
    %42 = vector.load %arg4[%c5, %c0_22] : memref<8x128xf32, #tpu.memory_space<vmem>>, vector<1x128xf32>
    %c6 = arith.constant 6 : index
    %c0_23 = arith.constant 0 : index
    %43 = vector.load %arg4[%c6, %c0_23] : memref<8x128xf32, #tpu.memory_space<vmem>>, vector<1x128xf32>
    %c4 = arith.constant 4 : index
    %c0_24 = arith.constant 0 : index
    %44 = vector.load %arg4[%c4, %c0_24] : memref<8x128xf32, #tpu.memory_space<vmem>>, vector<1x128xf32>
    %45 = arith.truncf %40 : vector<1x128xf32> to vector<1x128xbf16>
    %cst_25 = arith.constant dense<0.000000e+00> : vector<1x128xf32>
    %46 = tpu.matmul %45, %41, %cst_25 {dimension_numbers = #tpu.dot_dimension_numbers<[1], [0], [0], [1], [0, 0, 1, 1], [], []>} : vector<1x128xbf16>, vector<128x128xbf16>, vector<1x128xf32> -> vector<1x128xf32>
    %47 = vector.broadcast %1 : f32 to vector<1x128xf32>
    %48 = arith.mulf %47, %42 : vector<1x128xf32>
    %49 = arith.addf %46, %48 : vector<1x128xf32>
    %50 = vector.broadcast %3 : f32 to vector<1x128xf32>
    %51 = arith.mulf %50, %43 : vector<1x128xf32>
    %52 = arith.addf %49, %51 : vector<1x128xf32>
    %53 = arith.addf %52, %44 : vector<1x128xf32>
    %cst_26 = arith.constant 0.000000e+00 : f32
    %54 = vector.broadcast %cst_26 : f32 to vector<1x128xf32>
    %55 = arith.maximumf %53, %54 : vector<1x128xf32>
    %c7 = arith.constant 7 : index
    %c0_27 = arith.constant 0 : index
    %56 = vector.load %arg4[%c7, %c0_27] : memref<8x128xf32, #tpu.memory_space<vmem>>, vector<1x128xf32>
    %57 = arith.mulf %55, %56 : vector<1x128xf32>
    %cst_28 = arith.constant dense<0.000000e+00> : vector<1xf32>
    %58 = vector.multi_reduction <add>, %57, %cst_28 [1] : vector<1x128xf32> to vector<1xf32>
    %59 = vector.shape_cast %58 : vector<1xf32> to vector<1x1xf32>
    %60 = vector.broadcast %5 : f32 to vector<1x1xf32>
    %61 = arith.addf %59, %60 : vector<1x1xf32>
    %cst_29 = arith.constant 2.000000e+01 : f32
    %62 = vector.broadcast %cst_29 : f32 to vector<1x1xf32>
    %63 = arith.cmpf ogt, %61, %62 : vector<1x1xf32>
    %cst_30 = arith.constant 2.000000e+01 : f32
    %64 = vector.broadcast %cst_30 : f32 to vector<1x1xf32>
    %65 = arith.minimumf %61, %64 : vector<1x1xf32>
    %66 = math.exp %65 : vector<1x1xf32>
    %67 = math.log1p %66 : vector<1x1xf32>
    %68 = arith.select %63, %61, %67 : vector<1x1xi1>, vector<1x1xf32>
    %c0_31 = arith.constant 0 : index
    %c0_32 = arith.constant 0 : index
    %c0_33 = arith.constant 0 : index
    %69 = vector.load %arg6[%c0_31, %c0_32, %c0_33] : memref<1x1x1xf32, #tpu.memory_space<vmem>>, vector<1x1x1xf32>
    %70 = vector.shape_cast %69 : vector<1x1x1xf32> to vector<1x1xf32>
    %71 = vector.shape_cast %68 : vector<1x1xf32> to vector<1x1x1xf32>
    tpu.vector_store %arg6[%c0_31, %c0_32, %c0_33], %71 {strides = array<i32>} : memref<1x1x1xf32, #tpu.memory_space<vmem>>, vector<1x1x1xf32>,
    return
  }
  func.func @transform_0(%arg0: i32) -> (i32, i32) {
    %c0_i32 = arith.constant 0 : i32
    %c0_i32_0 = arith.constant 0 : i32
    %c0_i32_1 = arith.constant 0 : i32
    return %c0_i32, %c0_i32_0 : i32, i32
  }
  func.func @transform_1(%arg0: i32) -> (i32, i32, i32) {
    %c0_i32 = arith.constant 0 : i32
    %c0_i32_0 = arith.constant 0 : i32
    %c0_i32_1 = arith.constant 0 : i32
    return %arg0, %c0_i32, %c0_i32_0 : i32, i32, i32
  }
  func.func @transform_2(%arg0: i32) -> (i32, i32, i32) {
    %c0_i32 = arith.constant 0 : i32
    %c0_i32_0 = arith.constant 0 : i32
    %c0_i32_1 = arith.constant 0 : i32
    return %arg0, %c0_i32, %c0_i32_0 : i32, i32, i32
  }
  func.func @transform_3(%arg0: i32) -> (i32, i32) {
    %c0_i32 = arith.constant 0 : i32
    %c0_i32_0 = arith.constant 0 : i32
    %c0_i32_1 = arith.constant 0 : i32
    return %c0_i32, %c0_i32_0 : i32, i32
  }
  func.func @transform_4(%arg0: i32) -> (i32, i32) {
    %c0_i32 = arith.constant 0 : i32
    %c0_i32_0 = arith.constant 0 : i32
    %c0_i32_1 = arith.constant 0 : i32
    return %c0_i32, %c0_i32_0 : i32, i32
  }
  func.func @transform_5(%arg0: i32) -> (i32, i32, i32) {
    %c0_i32 = arith.constant 0 : i32
    %c0_i32_0 = arith.constant 0 : i32
    %c0_i32_1 = arith.constant 0 : i32
    return %arg0, %c0_i32, %c0_i32_0 : i32, i32, i32
  }
}

</mosaic_0001>

<llo_original>
// kernel: gnn_decision_forward_batched.1
$region0: #{gnn_decision_forward_batched.1}
  #allocation0 [shape = 'u32[]', space=smem, size = 0x4, offset = 0x4, fixed_abs, tag = 'smem constant byte address 0x4 - core index']
  #allocation1 [shape = 'u32[72,128]{1,0:T(1,128)}', space=vmem, size = 0x9000, scoped, tag = 'internal scratch']
  %s0 = inlined_call_operand.vmem [shape: f32[3,8], index: 0, kind: input, shape index: {}]
  %s1 = inlined_call_operand.vmem [shape: bf16[8,16,16], index: 1, kind: input, shape index: {}]
  %s2 = inlined_call_operand.vmem [shape: f32[8,16,1], index: 2, kind: input, shape index: {}]
  %s3 = inlined_call_operand.vmem [shape: f32[8,128], index: 3, kind: input, shape index: {}]
  %s4 = inlined_call_operand.hbm [shape: bf16[384,128], index: 4, kind: input, shape index: {}]
  %s5 = inlined_call_operand.vmem [shape: f32[8,1,1], index: 5, kind: output, shape index: {}]
  %s6 = sld [smem:[#allocation0]]
  $region61: #{gnn_decision_forward_batched.1} parent=0
    _
  %s8 = ssub.s32 1, %s6
  %s9 = scalar_select 0, %s8, %s6
  $region1: #{gnn_decision_forward_batched.1} parent=0
    #allocation2 [shape = 'u8[2048]{0}', space=smem, size = 0x800, scoped, tag = 'input window, operand 0, single buffered']
    #allocation3 [shape = 's32[2]{0}', space=sflag, size = 0x8, scoped, tag = 'scoped memory for gnn_decision_forward_batched.1']
    #allocation4 [shape = 's32[2]{0}', space=sflag, size = 0x8, scoped, tag = 'scoped memory for gnn_decision_forward_batched.1']
    #allocation5 [shape = 'u8[98304]{0}', space=vmem, size = 0x18000, scoped, tag = 'input window, operand 4, single buffered']
    %10 = vsyncpa [#allocation4], 0
    %11 = vsyncpa [#allocation3], 0
    loop: start=0, step=1, limit=10
    $region2: #{gnn_decision_forward_batched.1} parent=1 // loop_pre_header
      _
    $region3: #{gnn_decision_forward_batched.1} parent=1 // loop_header
      %s13 = sphi 0, %s17
      %p14 = scmp.ge.s32.totalorder %s13, 10
      %s21 = sphi 0, %s21
      %s23 = sphi 0, %s21
      %s24 = sphi 0, %s23
      %s38 = sphi 0, %s24
      %s44 = sphi 0, %s46
      %s47 = sphi 0, %s44
      %s48 = sphi 0, %s47
      %s64 = sphi 0, %s48
      %s70 = sphi 0, %s72
      %s73 = sphi 0, %s70
      %s74 = sphi 0, %s73
      %s90 = sphi 0, %s74
      %s94 = sphi 0, %s94
      %s96 = sphi 0, %s94
      %s97 = sphi 0, %s96
      %s111 = sphi 0, %s97
      %s115 = sphi 0, %s115
      %s117 = sphi 0, %s115
      %s118 = sphi 0, %s117
      %s132 = sphi 0, %s118
      %s138 = sphi 0, %s140
      %s141 = sphi 0, %s138
      %s142 = sphi 0, %s141
      %s158 = sphi 0, %s142
    $region4: #{gnn_decision_forward_batched.1} parent=1 // loop_header_branch
      %16 = sbr.rel (%p14) target = $region8
    $region5: #{gnn_decision_forward_batched.1} parent=1 // loop_body
      %s18 = ssub.s32 %s13, 1
      %s19 = ssub.s32 %s13, 2
      %s20 = sadd.s32 %s13, 1
      %s22 = sadd.s32 %s21, 1
      %p25 = scmp.eq.s32.totalorder %s13, 7
      %p26 = scmp.ne.s32.totalorder %s21, %s23
      %p27 = scmp.eq.s32.totalorder %s13, 0
      %p28 = por %p26, %p27
      %p29 = scmp.ne.s32.totalorder %s21, %s23
      %p30 = scmp.eq.s32.totalorder %s18, 7
      %p31 = por %p29, %p30
      %p32 = scmp.ne.s32.totalorder %s23, %s24
      %p33 = scmp.eq.s32.totalorder %s18, 0
      %p34 = por %p32, %p33
      %p35 = scmp.ne.s32.totalorder %s23, %s24
      %p36 = scmp.eq.s32.totalorder %s19, 7
      %p37 = por %p35, %p36
      %p39 = scmp.ne.s32.totalorder %s24, %s38
      %p40 = scmp.eq.s32.totalorder %s19, 0
      %p41 = por %p39, %p40
      %s42 = ssub.s32 %s13, %s20
      %p43 = scmp.eq.s32.totalorder %s42, 0
      %s45 = sadd.s32 %s44, 1
      %s46 = scalar_select %p43, %s44, %s45
      %p49 = pneg %p43
      %p50 = scmp.eq.s32.totalorder %s13, 7
      %p51 = por %p49, %p50
      %p52 = scmp.ne.s32.totalorder %s44, %s47
      %p53 = scmp.eq.s32.totalorder %s13, 0
      %p54 = por %p52, %p53
      %p55 = scmp.ne.s32.totalorder %s44, %s47
      %p56 = scmp.eq.s32.totalorder %s18, 7
      %p57 = por %p55, %p56
      %p58 = scmp.ne.s32.totalorder %s47, %s48
      %p59 = scmp.eq.s32.totalorder %s18, 0
      %p60 = por %p58, %p59
      %p61 = scmp.ne.s32.totalorder %s47, %s48
      %p62 = scmp.eq.s32.totalorder %s19, 7
      %p63 = por %p61, %p62
      %p65 = scmp.ne.s32.totalorder %s48, %s64
      %p66 = scmp.eq.s32.totalorder %s19, 0
      %p67 = por %p65, %p66
      %s68 = ssub.s32 %s13, %s20
      %p69 = scmp.eq.s32.totalorder %s68, 0
      %s71 = sadd.s32 %s70, 1
      %s72 = scalar_select %p69, %s70, %s71
      %p75 = pneg %p69
      %p76 = scmp.eq.s32.totalorder %s13, 7
      %p77 = por %p75, %p76
      %p78 = scmp.ne.s32.totalorder %s70, %s73
      %p79 = scmp.eq.s32.totalorder %s13, 0
      %p80 = por %p78, %p79
      %p81 = scmp.ne.s32.totalorder %s70, %s73
      %p82 = scmp.eq.s32.totalorder %s18, 7
      %p83 = por %p81, %p82
      %p84 = scmp.ne.s32.totalorder %s73, %s74
      %p85 = scmp.eq.s32.totalorder %s18, 0
      %p86 = por %p84, %p85
      %p87 = scmp.ne.s32.totalorder %s73, %s74
      %p88 = scmp.eq.s32.totalorder %s19, 7
      %p89 = por %p87, %p88
      %p91 = scmp.ne.s32.totalorder %s74, %s90
      %p92 = scmp.eq.s32.totalorder %s19, 0
      %p93 = por %p91, %p92
      %s95 = sadd.s32 %s94, 1
      %p98 = scmp.eq.s32.totalorder %s13, 7
      %p99 = scmp.ne.s32.totalorder %s94, %s96
      %p100 = scmp.eq.s32.totalorder %s13, 0
      %p101 = por %p99, %p100
      %p102 = scmp.ne.s32.totalorder %s94, %s96
      %p103 = scmp.eq.s32.totalorder %s18, 7
      %p104 = por %p102, %p103
      %p105 = scmp.ne.s32.totalorder %s96, %s97
      %p106 = scmp.eq.s32.totalorder %s18, 0
      %p107 = por %p105, %p106
      %p108 = scmp.ne.s32.totalorder %s96, %s97
      %p109 = scmp.eq.s32.totalorder %s19, 7
      %p110 = por %p108, %p109
      %p112 = scmp.ne.s32.totalorder %s97, %s111
      %p113 = scmp.eq.s32.totalorder %s19, 0
      %p114 = por %p112, %p113
      %s116 = sadd.s32 %s115, 1
      %p119 = scmp.eq.s32.totalorder %s13, 7
      %p120 = scmp.ne.s32.totalorder %s115, %s117
      %p121 = scmp.eq.s32.totalorder %s13, 0
      %p122 = por %p120, %p121
      %p123 = scmp.ne.s32.totalorder %s115, %s117
      %p124 = scmp.eq.s32.totalorder %s18, 7
      %p125 = por %p123, %p124
      %p126 = scmp.ne.s32.totalorder %s117, %s118
      %p127 = scmp.eq.s32.totalorder %s18, 0
      %p128 = por %p126, %p127
      %p129 = scmp.ne.s32.totalorder %s117, %s118
      %p130 = scmp.eq.s32.totalorder %s19, 7
      %p131 = por %p129, %p130
      %p133 = scmp.ne.s32.totalorder %s118, %s132
      %p134 = scmp.eq.s32.totalorder %s19, 0
      %p135 = por %p133, %p134
      %s136 = ssub.s32 %s13, %s20
      %p137 = scmp.eq.s32.totalorder %s136, 0
      %s139 = sadd.s32 %s138, 1
      %s140 = scalar_select %p137, %s138, %s139
      %p143 = pneg %p137
      %p144 = scmp.eq.s32.totalorder %s13, 7
      %p145 = por %p143, %p144
      %p146 = scmp.ne.s32.totalorder %s138, %s141
      %p147 = scmp.eq.s32.totalorder %s13, 0
      %p148 = por %p146, %p147
      %p149 = scmp.ne.s32.totalorder %s138, %s141
      %p150 = scmp.eq.s32.totalorder %s18, 7
      %p151 = por %p149, %p150
      %p152 = scmp.ne.s32.totalorder %s141, %s142
      %p153 = scmp.eq.s32.totalorder %s18, 0
      %p154 = por %p152, %p153
      %p155 = scmp.ne.s32.totalorder %s141, %s142
      %p156 = scmp.eq.s32.totalorder %s19, 7
      %p157 = por %p155, %p156
      %p159 = scmp.ne.s32.totalorder %s142, %s158
      %p160 = scmp.eq.s32.totalorder %s19, 0
      %p161 = por %p159, %p160
      %p162 = scmp.le.s32.totalorder 1, %s13
      %p163 = scmp.lt.s32.totalorder %s13, 9
      %p164 = pnand %p162, %p163
      %p165 = pneg %p164
      // Predicated region
      $region9: #{gnn_decision_forward_batched.1} parent=5 // pred_check
        _
      $region10: #{gnn_decision_forward_batched.1} parent=5 // pred_check_branch
        %167 = sbr.rel (%p164) target = $region12
      $region11: #{gnn_decision_forward_batched.1} parent=5 // pred_region
        %s168 = ssub.s32 %s13, 1
        // Predicated region
        $region13: #{gnn_decision_forward_batched.1} parent=11 // pred_check
          %p169 = pneg %p34
        $region14: #{gnn_decision_forward_batched.1} parent=11 // pred_check_branch
          %171 = sbr.rel (%p169) target = $region16
        $region15: #{gnn_decision_forward_batched.1} parent=11 // pred_region
          %173 = vsyncadd [#allocation4], 0
          %s175 = sshll.u32 %s0, 4
          %s176 = int_to_ptr.vmem [resolvable:$true] %s175
          %178 = dma.vmem_to_smem %s176, 64, [#allocation2], [#allocation4]
        $region16: #{gnn_decision_forward_batched.1} parent=11 // pred_fallthru
          _
        // Predicated region
        $region17: #{gnn_decision_forward_batched.1} parent=11 // pred_check
          %p179 = pneg %p107
        $region18: #{gnn_decision_forward_batched.1} parent=11 // pred_check_branch
          %181 = sbr.rel (%p179) target = $region20
        $region19: #{gnn_decision_forward_batched.1} parent=11 // pred_region
          _
        $region20: #{gnn_decision_forward_batched.1} parent=11 // pred_fallthru
          _
        // Predicated region
        $region21: #{gnn_decision_forward_batched.1} parent=11 // pred_check
          %p182 = pneg %p128
        $region22: #{gnn_decision_forward_batched.1} parent=11 // pred_check_branch
          %184 = sbr.rel (%p182) target = $region24
        $region23: #{gnn_decision_forward_batched.1} parent=11 // pred_region
          %186 = vsyncadd [#allocation3], 0
          %s187 = sshll.u32 %s4, 4
          %s188 = int_to_ptr.hbm [resolvable:$true] %s187
          %s189 = sshll.u32 [#allocation5], 4
          %s190 = int_to_ptr.vmem [resolvable:$true] %s189
          %195 = dma.hbm_to_vmem [thread:$0]  %s188, 3072, %s190, [#allocation3], 64, 64, 4
        $region24: #{gnn_decision_forward_batched.1} parent=11 // pred_fallthru
          _
      $region12: #{gnn_decision_forward_batched.1} parent=5 // pred_fallthru
        _
      %p196 = scmp.lt.s32.totalorder %s13, 8
      // Predicated region
      $region25: #{gnn_decision_forward_batched.1} parent=5 // pred_check
        %p197 = pneg %p196
      $region26: #{gnn_decision_forward_batched.1} parent=5 // pred_check_branch
        %199 = sbr.rel (%p197) target = $region28
      $region27: #{gnn_decision_forward_batched.1} parent=5 // pred_region
        // Predicated region
        $region29: #{gnn_decision_forward_batched.1} parent=27 // pred_check
          %p200 = pneg %p54
        $region30: #{gnn_decision_forward_batched.1} parent=27 // pred_check_branch
          %202 = sbr.rel (%p200) target = $region32
        $region31: #{gnn_decision_forward_batched.1} parent=27 // pred_region
          %p203 = scmp.lt.s32.totalorder %s13, 7
          %s204 = scalar_select %p203, %s13, 7
          %s205 = smul.addr %s204, 2
          %s206 = smul.addr %s205, 4
          %s207 = scalar_lea.vmem %s1, %s206
        $region32: #{gnn_decision_forward_batched.1} parent=27 // pred_fallthru
          _
        // Predicated region
        $region33: #{gnn_decision_forward_batched.1} parent=27 // pred_check
          %p208 = pneg %p80
        $region34: #{gnn_decision_forward_batched.1} parent=27 // pred_check_branch
          %210 = sbr.rel (%p208) target = $region36
        $region35: #{gnn_decision_forward_batched.1} parent=27 // pred_region
          %p211 = scmp.lt.s32.totalorder %s13, 7
          %s212 = scalar_select %p211, %s13, 7
          %s213 = smul.addr %s212, 2
          %s214 = smul.addr %s213, 8
          %s215 = scalar_lea.vmem %s2, %s214
        $region36: #{gnn_decision_forward_batched.1} parent=27 // pred_fallthru
          _
      $region28: #{gnn_decision_forward_batched.1} parent=5 // pred_fallthru
        _
      %p216 = scmp.le.s32.totalorder 1, %s13
      %p217 = scmp.lt.s32.totalorder %s13, 9
      %p218 = pnand %p216, %p217
      %p219 = pneg %p218
      // Predicated region
      $region37: #{gnn_decision_forward_batched.1} parent=5 // pred_check
        _
      $region38: #{gnn_decision_forward_batched.1} parent=5 // pred_check_branch
        %221 = sbr.rel (%p218) target = $region40
      $region39: #{gnn_decision_forward_batched.1} parent=5 // pred_region
        %s222 = ssub.s32 %s13, 1
        // Predicated region
        $region41: #{gnn_decision_forward_batched.1} parent=39 // pred_check
          %p223 = pneg %p34
        $region42: #{gnn_decision_forward_batched.1} parent=39 // pred_check_branch
          %225 = sbr.rel (%p223) target = $region44
        $region43: #{gnn_decision_forward_batched.1} parent=39 // pred_region
          %227 = dma.done [#allocation4], 64
        $region44: #{gnn_decision_forward_batched.1} parent=39 // pred_fallthru
          _
        // Predicated region
        $region45: #{gnn_decision_forward_batched.1} parent=39 // pred_check
          %p228 = pneg %p128
        $region46: #{gnn_decision_forward_batched.1} parent=39 // pred_check_branch
          %230 = sbr.rel (%p228) target = $region48
        $region47: #{gnn_decision_forward_batched.1} parent=39 // pred_region
          %232 = dma.done [#allocation3], 3072
        $region48: #{gnn_decision_forward_batched.1} parent=39 // pred_fallthru
          _
        %233 = sfence
        %p234 = pneg %p34
        %p235 = pneg %p31
        %p236 = scmp.lt.s32.totalorder %s18, 7
        %s237 = scalar_select %p236, %s18, 7
        %s238 = smul.addr %s237, 2
        %s239 = smul.addr %s238, 4
        %s240 = scalar_lea.vmem %s1, %s239
        %p241 = pneg %p60
        %p242 = pneg %p57
        %p243 = scmp.lt.s32.totalorder %s18, 7
        %s244 = scalar_select %p243, %s18, 7
        %s245 = smul.addr %s244, 2
        %s246 = smul.addr %s245, 8
        %s247 = scalar_lea.vmem %s2, %s246
        %p248 = pneg %p86
        %p249 = pneg %p83
        %p250 = pneg %p107
        %p251 = pneg %p104
        %p252 = pneg %p128
        %p253 = pneg %p125
        %p254 = pneg %p154
        %p255 = pneg %p151
        %p256 = scmp.lt.s32.totalorder %s18, 7
        %s257 = scalar_select %p256, %s18, 7
        %s258 = scalar_lea.vmem %s5, %s257
        %p259 = scmp.lt.s32.totalorder %s18, 7
        %s260 = scalar_select %p259, %s18, 7
        %s261 = smul.addr %s260, 2
        %s262 = smul.addr %s261, 4
        %s263 = scalar_lea.vmem %s1, %s262
        %p264 = scmp.lt.s32.totalorder %s18, 7
        %s265 = scalar_select %p264, %s18, 7
        %s266 = smul.addr %s265, 2
        %s267 = smul.addr %s266, 8
        %s268 = scalar_lea.vmem %s2, %s267
        %p269 = scmp.lt.s32.totalorder %s18, 7
        %s270 = scalar_select %p269, %s18, 7
        %s271 = scalar_lea.vmem %s5, %s270
        %s273 = sld [smem:[#allocation2 + %s18]]
        %s274 = sshra.s32 %s18, 7
        %s275 = sand.u32 %s18, 127
        %s276 = sadd.s32 %s274, 1
        %s277 = smul.u32 %s276, 128
        %s278 = sshra.s32 %s18, 7
        %s279 = sand.u32 %s18, 127
        %s280 = sadd.s32 %s277, %s279
        %s281 = sld [smem:[#allocation2 + %s280]]
        %s282 = sadd.s32 %s274, 2
        %s283 = smul.u32 %s282, 128
        %s284 = sadd.s32 %s283, %s279
        %s285 = sld [smem:[#allocation2 + %s284]]
        %v286 = vld [vmem:[%s263] sm:$0xf]
        %v287 = vld [vmem:[%s263 + $0x4] sm:$0xf]
        %v288 = vld [vmem:[%s268] sm:$0xff]
        %v289 = vld [vmem:[%s268 + $0x8] sm:$0xff]
        %v290 = vld [vmem:[%s3] sm:$0x1]
        %v291 = vld [vmem:[%s3 + $0x1] sm:$0x1]
        %v292 = vld [vmem:[%s3 + $0x2] sm:$0x1]
        %v293 = vld [vmem:[%s3 + $0x3] sm:$0x1]
        %295 = vset.pattern.permute.xlu0 0
        %296 = vperm.xlu0 %295, %v288
        %v297 = vpop.permute.xlu0 %296
        %300 = vset.pattern.permute.xlu0 0
        %301 = vperm.xlu0 %300, %v289
        %v302 = vpop.permute.xlu0 %301
        %v304 = vperm.slane %v290, 0
        %v305 = vmul.f32 %v297, %v304
        %v306 = vmul.f32 %v302, %v304
        %v307 = vpack.c.bf16 %v306, %v305
        %v308 = vperm.slane %v291, 0
        %v309 = vmul.f32 %v297, %v308
        %v310 = vmul.f32 %v302, %v308
        %v313 = vunpack.c.l.b16 %v286
        %v314 = vunpack.c.l.b16 %v287
        %v315 = vpack.c.b16 %v314, %v313
        %vm316 = vcmask 130048
        %v318 = vsel %vm316, %v315, 0
        %320 = vmatpush.bf16.msra.mxu0 0
        %321 = vmatpush.bf16.msra.mxu0 0
        %322 = vmatpush.bf16.msra.mxu0 0
        %323 = vmatpush.bf16.msra.mxu0 0
        %324 = vmatpush.bf16.msra.mxu0 0
        %325 = vmatpush.bf16.msra.mxu0 0
        %326 = vmatpush.bf16.msra.mxu0 0
        %327 = vmatpush.bf16.msra.mxu0 %v307
        %328 = vmatmul.bf16.gmra.mxu0 %v318
        %v329 = vpop.f32.mrf.mxu0
        %v330 = vadd.f32 %v309, %v329
        %v331 = vpop.f32.mrf.mxu0
        %v332 = vadd.f32 %v310, %v331
        %333 = vdwg.mxu0
        %v334 = vperm.slane %v292, 0
        %v335 = vadd.f32 %v330, %v334
        %v336 = vadd.f32 %v332, %v334
        %v337 = vmax.f32 %v335, 0.0
        %v338 = vmax.f32 %v336, 0.0
        %v339 = vpack.c.bf16 %v337, %v337
        %v340 = vpack.c.bf16 %v338, %v338
        %v343 = vunpack.c.l.b16 %v339
        %v344 = vunpack.c.l.b16 %v340
        %v345 = vpack.c.b16 %v344, %v343
        %347 = vmatpush.bf16.msra.mxu0 0
        %348 = vmatpush.bf16.msra.mxu0 0
        %349 = vmatpush.bf16.msra.mxu0 0
        %350 = vmatpush.bf16.msra.mxu0 0
        %351 = vmatpush.bf16.msra.mxu0 0
        %352 = vmatpush.bf16.msra.mxu0 0
        %353 = vmatpush.bf16.msra.mxu0 0
        %354 = vmatpush.bf16.msra.mxu0 %v345
        %355 = vmatmul.bf16.gmra.mxu0 %v318
        %v356 = vpop.f32.mrf.mxu0
        %v357 = vadd.f32 0.0, %v356
        %v358 = vpop.f32.mrf.mxu0
        %v359 = vadd.f32 0.0, %v358
        %360 = vdwg.mxu0
        %v361 = vpack.c.bf16 %v357, %v357
        %v362 = vpack.c.bf16 %v359, %v359
        %v365 = vunpack.c.l.b16 %v361
        %v366 = vunpack.c.l.b16 %v362
        %v367 = vpack.c.b16 %v366, %v365
        %v369 = vld [vmem:[#allocation5] sm:$0xf]
        %v370 = vld [vmem:[#allocation5 + $0x4] sm:$0xf]
        %v371 = vld [vmem:[#allocation5 + $0x8] sm:$0xf]
        %v372 = vld [vmem:[#allocation5 + $0xc] sm:$0xf]
        %v373 = vld [vmem:[#allocation5 + $0x10] sm:$0xf]
        %v374 = vld [vmem:[#allocation5 + $0x14] sm:$0xf]
        %v375 = vld [vmem:[#allocation5 + $0x18] sm:$0xf]
        %v376 = vld [vmem:[#allocation5 + $0x1c] sm:$0xf]
        %v377 = vld [vmem:[#allocation5 + $0x20] sm:$0xf]
        %v378 = vld [vmem:[#allocation5 + $0x24] sm:$0xf]
        %v379 = vld [vmem:[#allocation5 + $0x28] sm:$0xf]
        %v380 = vld [vmem:[#allocation5 + $0x2c] sm:$0xf]
        %v381 = vld [vmem:[#allocation5 + $0x30] sm:$0xf]
        %v382 = vld [vmem:[#allocation5 + $0x34] sm:$0xf]
        %v383 = vld [vmem:[#allocation5 + $0x38] sm:$0xf]
        %v384 = vld [vmem:[#allocation5 + $0x3c] sm:$0xf]
        %v385 = vld [vmem:[#allocation5 + $0x40] sm:$0xf]
        %v386 = vld [vmem:[#allocation5 + $0x44] sm:$0xf]
        %v387 = vld [vmem:[#allocation5 + $0x48] sm:$0xf]
        %v388 = vld [vmem:[#allocation5 + $0x4c] sm:$0xf]
        %v389 = vld [vmem:[#allocation5 + $0x50] sm:$0xf]
        %v390 = vld [vmem:[#allocation5 + $0x54] sm:$0xf]
        %v391 = vld [vmem:[#allocation5 + $0x58] sm:$0xf]
        %v392 = vld [vmem:[#allocation5 + $0x5c] sm:$0xf]
        %v393 = vld [vmem:[#allocation5 + $0x60] sm:$0xf]
        %v394 = vld [vmem:[#allocation5 + $0x64] sm:$0xf]
        %v395 = vld [vmem:[#allocation5 + $0x68] sm:$0xf]
        %v396 = vld [vmem:[#allocation5 + $0x6c] sm:$0xf]
        %v397 = vld [vmem:[#allocation5 + $0x70] sm:$0xf]
        %v398 = vld [vmem:[#allocation5 + $0x74] sm:$0xf]
        %v399 = vld [vmem:[#allocation5 + $0x78] sm:$0xf]
        %v400 = vld [vmem:[#allocation5 + $0x7c] sm:$0xf]
        %v401 = vperm.slane %v293, 0
        %v434 = vunpack.c.l.b16 %v369
        %v435 = vunpack.c.l.b16 %v370
        %v436 = vunpack.c.l.b16 %v371
        %v437 = vunpack.c.l.b16 %v372
        %v438 = vunpack.c.l.b16 %v373
        %v439 = vunpack.c.l.b16 %v374
        %v440 = vunpack.c.l.b16 %v375
        %v441 = vunpack.c.l.b16 %v376
        %v442 = vunpack.c.l.b16 %v377
        %v443 = vunpack.c.l.b16 %v378
        %v444 = vunpack.c.l.b16 %v379
        %v445 = vunpack.c.l.b16 %v380
        %v446 = vunpack.c.l.b16 %v381
        %v447 = vunpack.c.l.b16 %v382
        %v448 = vunpack.c.l.b16 %v383
        %v449 = vunpack.c.l.b16 %v384
        %v450 = vunpack.c.l.b16 %v385
        %v451 = vunpack.c.l.b16 %v386
        %v452 = vunpack.c.l.b16 %v387
        %v453 = vunpack.c.l.b16 %v388
        %v454 = vunpack.c.l.b16 %v389
        %v455 = vunpack.c.l.b16 %v390
        %v456 = vunpack.c.l.b16 %v391
        %v457 = vunpack.c.l.b16 %v392
        %v458 = vunpack.c.l.b16 %v393
        %v459 = vunpack.c.l.b16 %v394
        %v460 = vunpack.c.l.b16 %v395
        %v461 = vunpack.c.l.b16 %v396
        %v462 = vunpack.c.l.b16 %v397
        %v463 = vunpack.c.l.b16 %v398
        %v464 = vunpack.c.l.b16 %v399
        %v465 = vunpack.c.l.b16 %v400
        %v466 = vpack.c.b16 %v435, %v434
        %v467 = vpack.c.b16 %v437, %v436
        %v468 = vpack.c.b16 %v439, %v438
        %v469 = vpack.c.b16 %v441, %v440
        %v470 = vpack.c.b16 %v443, %v442
        %v471 = vpack.c.b16 %v445, %v444
        %v472 = vpack.c.b16 %v447, %v446
        %v473 = vpack.c.b16 %v449, %v448
        %v474 = vpack.c.b16 %v451, %v450
        %v475 = vpack.c.b16 %v453, %v452
        %v476 = vpack.c.b16 %v455, %v454
        %v477 = vpack.c.b16 %v457, %v456
        %v478 = vpack.c.b16 %v459, %v458
        %v479 = vpack.c.b16 %v461, %v460
        %v480 = vpack.c.b16 %v463, %v462
        %v481 = vpack.c.b16 %v465, %v464
        %498 = vmatpush.bf16.msra.mxu0 %v473
        %499 = vmatpush.bf16.msra.mxu0 %v472
        %500 = vmatpush.bf16.msra.mxu0 %v471
        %501 = vmatpush.bf16.msra.mxu0 %v470
        %502 = vmatpush.bf16.msra.mxu0 %v469
        %503 = vmatpush.bf16.msra.mxu0 %v468
        %504 = vmatpush.bf16.msra.mxu0 %v467
        %505 = vmatpush.bf16.msra.mxu0 %v466
        %506 = vmatmul.bf16.gmra.mxu0 %v367
        %v507 = vpop.f32.mrf.mxu0
        %v508 = vadd.f32 %v401, %v507
        %v509 = vpop.f32.mrf.mxu0
        %v510 = vadd.f32 %v401, %v509
        %511 = vdwg.mxu0
        %512 = vmatpush.bf16.msra.mxu0 %v481
        %513 = vmatpush.bf16.msra.mxu0 %v480
        %514 = vmatpush.bf16.msra.mxu0 %v479
        %515 = vmatpush.bf16.msra.mxu0 %v478
        %516 = vmatpush.bf16.msra.mxu0 %v477
        %517 = vmatpush.bf16.msra.mxu0 %v476
        %518 = vmatpush.bf16.msra.mxu0 %v475
        %519 = vmatpush.bf16.msra.mxu0 %v474
        %520 = vmatmul.bf16.gmra.mxu0 %v345
        %v521 = vpop.f32.mrf.mxu0
        %v522 = vadd.f32 %v508, %v521
        %v523 = vpop.f32.mrf.mxu0
        %v524 = vadd.f32 %v510, %v523
        %525 = vdwg.mxu0
        %v526 = vmax.f32 %v522, 0.0
        %v527 = vmax.f32 %v524, 0.0
        %v528 = vadd.f32 %v526, %v527
        %v529 = vrot.slane %v528, 4
        %v530 = vadd.f32 %v528, %v529
        %v531 = vrot.slane %v530, 2
        %v532 = vadd.f32 %v530, %v531
        %v533 = vrot.slane %v532, 1
        %v534 = vadd.f32 %v532, %v533
        %v535 = vmul.f32 %v534, 0.0625
        %v536 = vld [vmem:[#allocation5 + $0x80] sm:$0xf]
        %v537 = vld [vmem:[#allocation5 + $0x84] sm:$0xf]
        %v538 = vld [vmem:[#allocation5 + $0x88] sm:$0xf]
        %v539 = vld [vmem:[#allocation5 + $0x8c] sm:$0xf]
        %v540 = vld [vmem:[#allocation5 + $0x90] sm:$0xf]
        %v541 = vld [vmem:[#allocation5 + $0x94] sm:$0xf]
        %v542 = vld [vmem:[#allocation5 + $0x98] sm:$0xf]
        %v543 = vld [vmem:[#allocation5 + $0x9c] sm:$0xf]
        %v544 = vld [vmem:[#allocation5 + $0xa0] sm:$0xf]
        %v545 = vld [vmem:[#allocation5 + $0xa4] sm:$0xf]
        %v546 = vld [vmem:[#allocation5 + $0xa8] sm:$0xf]
        %v547 = vld [vmem:[#allocation5 + $0xac] sm:$0xf]
        %v548 = vld [vmem:[#allocation5 + $0xb0] sm:$0xf]
        %v549 = vld [vmem:[#allocation5 + $0xb4] sm:$0xf]
        %v550 = vld [vmem:[#allocation5 + $0xb8] sm:$0xf]
        %v551 = vld [vmem:[#allocation5 + $0xbc] sm:$0xf]
        %v552 = vld [vmem:[%s3 + $0x5] sm:$0x1]
        %v553 = vld [vmem:[%s3 + $0x6] sm:$0x1]
        %v554 = vld [vmem:[%s3 + $0x4] sm:$0x1]
        %v555 = vpack.c.bf16 %v535, %v535
        %v556 = vstv %s273
        %v557 = vmul.f32 %v556, %v552
        %v574 = vunpack.c.l.b16 %v536
        %v575 = vunpack.c.l.b16 %v537
        %v576 = vunpack.c.l.b16 %v538
        %v577 = vunpack.c.l.b16 %v539
        %v578 = vunpack.c.l.b16 %v540
        %v579 = vunpack.c.l.b16 %v541
        %v580 = vunpack.c.l.b16 %v542
        %v581 = vunpack.c.l.b16 %v543
        %v582 = vunpack.c.l.b16 %v544
        %v583 = vunpack.c.l.b16 %v545
        %v584 = vunpack.c.l.b16 %v546
        %v585 = vunpack.c.l.b16 %v547
        %v586 = vunpack.c.l.b16 %v548
        %v587 = vunpack.c.l.b16 %v549
        %v588 = vunpack.c.l.b16 %v550
        %v589 = vunpack.c.l.b16 %v551
        %v590 = vpack.c.b16 %v575, %v574
        %v591 = vpack.c.b16 %v577, %v576
        %v592 = vpack.c.b16 %v579, %v578
        %v593 = vpack.c.b16 %v581, %v580
        %v594 = vpack.c.b16 %v583, %v582
        %v595 = vpack.c.b16 %v585, %v584
        %v596 = vpack.c.b16 %v587, %v586
        %v597 = vpack.c.b16 %v589, %v588
        %606 = vmatpush.bf16.msra.mxu0 %v597
        %607 = vmatpush.bf16.msra.mxu0 %v596
        %608 = vmatpush.bf16.msra.mxu0 %v595
        %609 = vmatpush.bf16.msra.mxu0 %v594
        %610 = vmatpush.bf16.msra.mxu0 %v593
        %611 = vmatpush.bf16.msra.mxu0 %v592
        %612 = vmatpush.bf16.msra.mxu0 %v591
        %613 = vmatpush.bf16.msra.mxu0 %v590
        %614 = vmatmul.bf16.gmra.mxu0 %v555
        %v615 = vpop.f32.mrf.mxu0
        %v616 = vadd.f32 %v557, %v615
        %v617 = vpop.f32.mrf.mxu0
        %618 = vdwg.mxu0
        %v619 = vstv %s281
        %v620 = vmul.f32 %v619, %v553
        %v621 = vadd.f32 %v616, %v620
        %v622 = vadd.f32 %v621, %v554
        %v623 = vmax.f32 %v622, 0.0
        %v624 = vld [vmem:[%s3 + $0x7] sm:$0x1]
        %v625 = vmul.f32 %v623, %v624
        %vm626 = vcmask 1040384
        %v627 = vsel %vm626, %v625, 0.0
        %628 = vadd.xlane.f32.xlu0 %v627
        %v629 = vpop.xlane.xlu0 %628
        %v630 = vstv %s285
        %v631 = vadd.f32 %v629, %v630
        %vm632 = vcmp.gt.f32.partialorder %v631, 20.0
        %v633 = vmin.f32 %v631, 20.0
        %v634 = vmul.f32 %v633, 1.442695
        %v635 = vpow.pop %v634
        %v636 = vadd.f32 %v635, 1.0
        %v637 = vlog2.pop %v636
        %v638 = vmul.f32 %v637, 0.6931472
        %v639 = vmul.f32 -0.5, %v635
        %v640 = vadd.f32 %v639, 1.0
        %v641 = vmul.f32 %v640, %v635
        %v642 = vand.u32 2147483647, %v635
        %vm643 = vcmp.lt.f32.partialorder %v642, 0.0004427343
        %v644 = vsel %vm643, %v641, %v638
        %v645 = vsel %vm632, %v631, %v644
        %vm646 = vcmask 0
        %647 = vst.msk [vmem:[%s271] sm:$0x1] %vm646, %v645
        %p648 = scmp.lt.s32.totalorder %s18, 7
        %s649 = scalar_select %p648, %s18, 7
        %s650 = scalar_lea.vmem %s5, %s649
        // Predicated region
        $region49: #{gnn_decision_forward_batched.1} parent=39 // pred_check
          %p651 = pneg %p151
        $region50: #{gnn_decision_forward_batched.1} parent=39 // pred_check_branch
          %653 = sbr.rel (%p651) target = $region52
        $region51: #{gnn_decision_forward_batched.1} parent=39 // pred_region
          _
        $region52: #{gnn_decision_forward_batched.1} parent=39 // pred_fallthru
          _
      $region40: #{gnn_decision_forward_batched.1} parent=5 // pred_fallthru
        _
      %p654 = scmp.le.s32.totalorder 2, %s13
      // Predicated region
      $region53: #{gnn_decision_forward_batched.1} parent=5 // pred_check
        %p655 = pneg %p654
      $region54: #{gnn_decision_forward_batched.1} parent=5 // pred_check_branch
        %657 = sbr.rel (%p655) target = $region56
      $region55: #{gnn_decision_forward_batched.1} parent=5 // pred_region
        %s658 = ssub.s32 %s13, 2
        // Predicated region
        $region57: #{gnn_decision_forward_batched.1} parent=55 // pred_check
          %p659 = pneg %p157
        $region58: #{gnn_decision_forward_batched.1} parent=55 // pred_check_branch
          %661 = sbr.rel (%p659) target = $region60
        $region59: #{gnn_decision_forward_batched.1} parent=55 // pred_region
          %p662 = scmp.lt.s32.totalorder %s19, 7
          %s663 = scalar_select %p662, %s19, 7
          %s664 = scalar_lea.vmem %s5, %s663
        $region60: #{gnn_decision_forward_batched.1} parent=55 // pred_fallthru
          _
      $region56: #{gnn_decision_forward_batched.1} parent=5 // pred_fallthru
        _
    $region6: #{gnn_decision_forward_batched.1} parent=1 // loop_footer
      %s17 = sadd.s32 1, %s13
    $region7: #{gnn_decision_forward_batched.1} parent=1 // loop_footer_branch
      %12 = sbr.rel target = $region3
    $region8: #{gnn_decision_forward_batched.1} parent=1 // loop_exit
      _
    %665 = vsyncpa [#allocation3], 1
    %s666 = scalar_lea.sflag [#allocation3], 1
    %667 = vsyncpa %s666, 1
    %668 = vsyncpa [#allocation4], 1
    %s669 = scalar_lea.sflag [#allocation4], 1
    %670 = vsyncpa %s669, 1

</llo_original>
